<compile_context>
chip_gen: v7x
topology: tpu7x:2x2x1
jax: 0.10.0
libtpu: 0.0.40
codegen_flags: <defaults>
</compile_context>

<pallas_src>
import jax
import jax.numpy as jnp
from jax.experimental import pallas as pl
from jax.experimental.pallas import tpu as pltpu

N_MFCCS = 40
H1, H2, H3 = 100, 30, 9
BN_EPS = 1e-5
LEAKY_SLOPE = 0.01  # PyTorch nn.LeakyReLU default negative_slope

H1_PAD = 128   # 100 -> 128 (lane-dense hidden activations / weight cols)
H2_PAD = 128   # 30  -> 128


def _round_up(n, m):
    return ((n + m - 1) // m) * m


# --------------------------------------------------------------------------
# Kernel: one batch tile -> three fused matmul+bias + LeakyReLU + sigmoid
# --------------------------------------------------------------------------
def _mlp_kernel(x_ref, w1_ref, b1_ref, w2_ref, b2_ref, w3_ref, b3_ref, o_ref):
    # bf16 MXU operands, f32 accumulate, f32 elementwise (v5e-safe).
    x = x_ref[...].astype(jnp.bfloat16)

    # Layer 1: fused Linear+BN (folded) -> LeakyReLU   (Dropout = identity)
    h = jnp.dot(x, w1_ref[...], preferred_element_type=jnp.float32) + b1_ref[...]
    h = jnp.where(h > 0, h, LEAKY_SLOPE * h)

    # Layer 2: fused Linear+BN (folded) -> LeakyReLU
    h = jnp.dot(h.astype(jnp.bfloat16), w2_ref[...],
                preferred_element_type=jnp.float32) + b2_ref[...]
    h = jnp.where(h > 0, h, LEAKY_SLOPE * h)

    # Layer 3: fused Linear+BN (folded), narrow N=9 output, no activation
    h = jnp.dot(h.astype(jnp.bfloat16), w3_ref[...],
                preferred_element_type=jnp.float32) + b3_ref[...]

    # Sigmoid as a single EUP tanh: sigmoid(h) = 0.5*(tanh(h/2)+1); exact,
    # no overflow for large |h|.
    o_ref[...] = (0.5 * (jnp.tanh(0.5 * h) + 1.0)).astype(o_ref.dtype)


# --------------------------------------------------------------------------
# Wrapper: batch-tiled grid, VMEM-resident folded parameters, narrow output
# --------------------------------------------------------------------------
def network_forward(x, fparams):
    """x: (B, 40) float32 or bfloat16.  fparams: folded+padded params."""
    b = x.shape[0]

    # Big batch tiles amortize the ~0.35 us/step fixed overhead; keep >= 2
    # grid steps for realistic batches so v7x's two TensorCores both work.
    tb = min(2048, max(128, _round_up((b + 1) // 2, 128)))
    grid = (pl.cdiv(b, tb),)   # ragged last block is masked by Pallas

    const = lambda i: (0, 0)   # parameters: same block every step -> resident
    in_specs = [
        pl.BlockSpec((tb, N_MFCCS), lambda i: (i, 0)),   # x, streamed unpadded
        pl.BlockSpec((N_MFCCS, H1_PAD), const),          # W1' (40, 128) bf16
        pl.BlockSpec((1, H1_PAD), const),                # b1' f32
        pl.BlockSpec((H1_PAD, H2_PAD), const),           # W2' (128, 128) bf16
        pl.BlockSpec((1, H2_PAD), const),                # b2' f32
        pl.BlockSpec((H2_PAD, H3), const),               # W3' (128, 9) bf16
        pl.BlockSpec((1, H3), const),                    # b3' (1, 9) f32
    ]
    out_specs = pl.BlockSpec((tb, H3), lambda i: (i, 0))  # narrow (tb, 9)

    param_bytes = sum(int(v.size) * v.dtype.itemsize for v in fparams.values())
    cost = pl.CostEstimate(
        flops=2 * b * (N_MFCCS * H1 + H1 * H2 + H2 * H3),
        transcendentals=b * H3,
        bytes_accessed=b * N_MFCCS * x.dtype.itemsize + b * H3 * 4 + param_bytes,
    )

    return pl.pallas_call(
        _mlp_kernel,
        out_shape=jax.ShapeDtypeStruct((b, H3), jnp.float32),
        grid=grid,
        in_specs=in_specs,
        out_specs=out_specs,
        compiler_params=pltpu.CompilerParams(
            dimension_semantics=("parallel",),   # split steps across TCs
        ),
        cost_estimate=cost,
    )(
        x,
        fparams["w1"], fparams["b1"],
        fparams["w2"], fparams["b2"],
        fparams["w3"], fparams["b3"],
    )


network_forward_jit = jax.jit(network_forward)


# --------------------------------------------------------------------------
# Parameters: raw (PyTorch-equivalent) init, then one-time fold + pad + cast
# --------------------------------------------------------------------------
def init_raw_params(key):
    """PyTorch-style init: Linear uniform(+-1/sqrt(fan_in)); fresh BatchNorm
    (gamma=1, beta=0, running_mean=0, running_var=1) as per-feature
    scale/shift."""
    ks = jax.random.split(key, 6)

    def linear(kw, kb, fan_in, fan_out):
        bound = 1.0 / jnp.sqrt(jnp.float32(fan_in))
        w = jax.random.uniform(kw, (fan_in, fan_out), jnp.float32, -bound, bound)
        b = jax.random.uniform(kb, (1, fan_out), jnp.float32, -bound, bound)
        return w, b

    def bn(num_features):
        gamma = jnp.ones((1, num_features), jnp.float32)
        beta = jnp.zeros((1, num_features), jnp.float32)
        r_mean = jnp.zeros((1, num_features), jnp.float32)
        r_var = jnp.ones((1, num_features), jnp.float32)
        scale = gamma * jax.lax.rsqrt(r_var + BN_EPS)
        shift = beta - r_mean * scale
        return scale, shift

    w1, b1 = linear(ks[0], ks[1], N_MFCCS, H1)
    w2, b2 = linear(ks[2], ks[3], H1, H2)
    w3, b3 = linear(ks[4], ks[5], H2, H3)
    s1, t1 = bn(H1)
    s2, t2 = bn(H2)
    s3, t3 = bn(H3)
    return dict(w1=w1, b1=b1, s1=s1, t1=t1,
                w2=w2, b2=b2, s2=s2, t2=t2,
                w3=w3, b3=b3, s3=s3, t3=t3)


def fold_and_pad_params(p):
    """One-time transform: fold BN into Linear (W' = W*scale, b' = b*scale+shift),
    zero-pad hidden dims to 128 lanes (output dim stays 9), and cast weights to
    bf16 (MXU operands); biases stay f32 (added post-matmul in f32)."""
    def fold(w, b, s, t):
        return w * s, b * s + t

    def pad2(a, rows, cols, dtype):
        a = jnp.pad(a, ((0, rows - a.shape[0]), (0, cols - a.shape[1])))
        return a.astype(dtype)

    w1, b1 = fold(p["w1"], p["b1"], p["s1"], p["t1"])
    w2, b2 = fold(p["w2"], p["b2"], p["s2"], p["t2"])
    w3, b3 = fold(p["w3"], p["b3"], p["s3"], p["t3"])
    return dict(
        w1=pad2(w1, N_MFCCS, H1_PAD, jnp.bfloat16),  # (40, 128)
        b1=pad2(b1, 1, H1_PAD, jnp.float32),
        w2=pad2(w2, H1_PAD, H2_PAD, jnp.bfloat16),   # (128, 128)
        b2=pad2(b2, 1, H2_PAD, jnp.float32),
        w3=pad2(w3, H2_PAD, H3, jnp.bfloat16),       # (128, 9)
        b3=pad2(b3, 1, H3, jnp.float32),             # (1, 9)
    )


# --------------------------------------------------------------------------
# Pure-JAX reference (eval-mode PyTorch semantics) for verification
# --------------------------------------------------------------------------
def _reference_forward(x, p):
    def leaky(v):
        return jnp.where(v > 0, v, LEAKY_SLOPE * v)
    h = leaky((x @ p["w1"] + p["b1"]) * p["s1"] + p["t1"])
    h = leaky((h @ p["w2"] + p["b2"]) * p["s2"] + p["t2"])
    h = (h @ p["w3"] + p["b3"]) * p["s3"] + p["t3"]
    return jax.nn.sigmoid(h)


if __name__ == "__main__":
    key = jax.random.PRNGKey(0)
    k_params, k_x = jax.random.split(key)

    batch = 8
    x = jax.random.normal(k_x, (batch, N_MFCCS), jnp.float32)

    raw = init_raw_params(k_params)
    folded = fold_and_pad_params(raw)

    out = network_forward_jit(x, folded)
    out = jax.block_until_ready(out)

    ref = _reference_forward(x, raw)
    assert out.shape == (batch, H3), out.shape
    # Tolerance covers the bf16 matmul operands (f32 accumulation, f32
    # elementwise math, exact tanh-based sigmoid).
    assert jnp.allclose(out, ref, atol=2e-2, rtol=2e-2), "mismatch vs reference"

    print("KERNEL_OK")
</pallas_src>

<mosaic_0001>
module attributes {stable_mosaic.version = 11 : i64} {
  func.func @_mlp_kernel(%arg0: i32, %arg1: memref<128x40xf32, #tpu.memory_space<vmem>>, %arg2: memref<40x128xbf16, #tpu.memory_space<vmem>>, %arg3: memref<1x128xf32, #tpu.memory_space<vmem>>, %arg4: memref<128x128xbf16, #tpu.memory_space<vmem>>, %arg5: memref<1x128xf32, #tpu.memory_space<vmem>>, %arg6: memref<128x9xbf16, #tpu.memory_space<vmem>>, %arg7: memref<1x9xf32, #tpu.memory_space<vmem>>, %arg8: memref<128x9xf32, #tpu.memory_space<vmem>>) attributes {dimension_semantics = [#tpu.dimension_semantics<parallel>], iteration_bounds = array<i64: 1>, scalar_prefetch = 0 : i64, scratch_operands = 0 : i64, tpu.core_type = #tpu.core_type<tc>, window_params = [{transform_indices = @transform_0, window_bounds = array<i64: 128, 40>}, {pipeline_mode = #tpu.pipeline_mode<synchronous>, transform_indices = @transform_1, window_bounds = array<i64: 40, 128>}, {pipeline_mode = #tpu.pipeline_mode<synchronous>, transform_indices = @transform_2, window_bounds = array<i64: 1, 128>}, {pipeline_mode = #tpu.pipeline_mode<synchronous>, transform_indices = @transform_3, window_bounds = array<i64: 128, 128>}, {pipeline_mode = #tpu.pipeline_mode<synchronous>, transform_indices = @transform_4, window_bounds = array<i64: 1, 128>}, {pipeline_mode = #tpu.pipeline_mode<synchronous>, transform_indices = @transform_5, window_bounds = array<i64: 128, 9>}, {pipeline_mode = #tpu.pipeline_mode<synchronous>, transform_indices = @transform_6, window_bounds = array<i64: 1, 9>}, {transform_indices = @transform_7, window_bounds = array<i64: 128, 9>}]} {
    %c0 = arith.constant 0 : index
    %c0_0 = arith.constant 0 : index
    %0 = vector.load %arg1[%c0, %c0_0] : memref<128x40xf32, #tpu.memory_space<vmem>>, vector<128x40xf32>
    %1 = arith.truncf %0 : vector<128x40xf32> to vector<128x40xbf16>
    %c0_1 = arith.constant 0 : index
    %c0_2 = arith.constant 0 : index
    %2 = vector.load %arg2[%c0_1, %c0_2] : memref<40x128xbf16, #tpu.memory_space<vmem>>, vector<40x128xbf16>
    %cst = arith.constant dense<0.000000e+00> : vector<128x128xf32>
    %3 = tpu.matmul %1, %2, %cst {dimension_numbers = #tpu.dot_dimension_numbers<[1], [0], [0], [1], [0, 0, 1, 1], [], []>} : vector<128x40xbf16>, vector<40x128xbf16>, vector<128x128xf32> -> vector<128x128xf32>
    %c0_3 = arith.constant 0 : index
    %c0_4 = arith.constant 0 : index
    %4 = vector.load %arg3[%c0_3, %c0_4] : memref<1x128xf32, #tpu.memory_space<vmem>>, vector<1x128xf32>
    %5 = vector.broadcast %4 : vector<1x128xf32> to vector<128x128xf32>
    %6 = arith.addf %3, %5 : vector<128x128xf32>
    %cst_5 = arith.constant 0.000000e+00 : f32
    %7 = vector.broadcast %cst_5 : f32 to vector<128x128xf32>
    %8 = arith.cmpf ogt, %6, %7 : vector<128x128xf32>
    %cst_6 = arith.constant 0.00999999977 : f32
    %9 = vector.broadcast %cst_6 : f32 to vector<128x128xf32>
    %10 = arith.mulf %9, %6 : vector<128x128xf32>
    %11 = arith.select %8, %6, %10 : vector<128x128xi1>, vector<128x128xf32>
    %12 = arith.truncf %11 : vector<128x128xf32> to vector<128x128xbf16>
    %c0_7 = arith.constant 0 : index
    %c0_8 = arith.constant 0 : index
    %13 = vector.load %arg4[%c0_7, %c0_8] : memref<128x128xbf16, #tpu.memory_space<vmem>>, vector<128x128xbf16>
    %cst_9 = arith.constant dense<0.000000e+00> : vector<128x128xf32>
    %14 = tpu.matmul %12, %13, %cst_9 {dimension_numbers = #tpu.dot_dimension_numbers<[1], [0], [0], [1], [0, 0, 1, 1], [], []>} : vector<128x128xbf16>, vector<128x128xbf16>, vector<128x128xf32> -> vector<128x128xf32>
    %c0_10 = arith.constant 0 : index
    %c0_11 = arith.constant 0 : index
    %15 = vector.load %arg5[%c0_10, %c0_11] : memref<1x128xf32, #tpu.memory_space<vmem>>, vector<1x128xf32>
    %16 = vector.broadcast %15 : vector<1x128xf32> to vector<128x128xf32>
    %17 = arith.addf %14, %16 : vector<128x128xf32>
    %cst_12 = arith.constant 0.000000e+00 : f32
    %18 = vector.broadcast %cst_12 : f32 to vector<128x128xf32>
    %19 = arith.cmpf ogt, %17, %18 : vector<128x128xf32>
    %cst_13 = arith.constant 0.00999999977 : f32
    %20 = vector.broadcast %cst_13 : f32 to vector<128x128xf32>
    %21 = arith.mulf %20, %17 : vector<128x128xf32>
    %22 = arith.select %19, %17, %21 : vector<128x128xi1>, vector<128x128xf32>
    %23 = arith.truncf %22 : vector<128x128xf32> to vector<128x128xbf16>
    %c0_14 = arith.constant 0 : index
    %c0_15 = arith.constant 0 : index
    %24 = vector.load %arg6[%c0_14, %c0_15] : memref<128x9xbf16, #tpu.memory_space<vmem>>, vector<128x9xbf16>
    %cst_16 = arith.constant dense<0.000000e+00> : vector<128x9xf32>
    %25 = tpu.matmul %23, %24, %cst_16 {dimension_numbers = #tpu.dot_dimension_numbers<[1], [0], [0], [1], [0, 0, 1, 1], [], []>} : vector<128x128xbf16>, vector<128x9xbf16>, vector<128x9xf32> -> vector<128x9xf32>
    %c0_17 = arith.constant 0 : index
    %c0_18 = arith.constant 0 : index
    %26 = vector.load %arg7[%c0_17, %c0_18] : memref<1x9xf32, #tpu.memory_space<vmem>>, vector<1x9xf32>
    %27 = vector.broadcast %26 : vector<1x9xf32> to vector<128x9xf32>
    %28 = arith.addf %25, %27 : vector<128x9xf32>
    %cst_19 = arith.constant 5.000000e-01 : f32
    %29 = vector.broadcast %cst_19 : f32 to vector<128x9xf32>
    %30 = arith.mulf %29, %28 : vector<128x9xf32>
    %31 = math.tanh %30 : vector<128x9xf32>
    %cst_20 = arith.constant 1.000000e+00 : f32
    %32 = vector.broadcast %cst_20 : f32 to vector<128x9xf32>
    %33 = arith.addf %31, %32 : vector<128x9xf32>
    %cst_21 = arith.constant 5.000000e-01 : f32
    %34 = vector.broadcast %cst_21 : f32 to vector<128x9xf32>
    %35 = arith.mulf %34, %33 : vector<128x9xf32>
    %c0_22 = arith.constant 0 : index
    %c0_23 = arith.constant 0 : index
    %36 = vector.load %arg8[%c0_22, %c0_23] : memref<128x9xf32, #tpu.memory_space<vmem>>, vector<128x9xf32>
    tpu.vector_store %arg8[%c0_22, %c0_23], %35 {strides = array<i32>} : memref<128x9xf32, #tpu.memory_space<vmem>>, vector<128x9xf32>,
    return
  }
  func.func @transform_0(%arg0: i32) -> (i32, i32) {
    %c0_i32 = arith.constant 0 : i32
    %c0_i32_0 = arith.constant 0 : i32
    return %arg0, %c0_i32 : i32, i32
  }
  func.func @transform_1(%arg0: i32) -> (i32, i32) {
    %c0_i32 = arith.constant 0 : i32
    %c0_i32_0 = arith.constant 0 : i32
    %c0_i32_1 = arith.constant 0 : i32
    return %c0_i32, %c0_i32_0 : i32, i32
  }
  func.func @transform_2(%arg0: i32) -> (i32, i32) {
    %c0_i32 = arith.constant 0 : i32
    %c0_i32_0 = arith.constant 0 : i32
    %c0_i32_1 = arith.constant 0 : i32
    return %c0_i32, %c0_i32_0 : i32, i32
  }
  func.func @transform_3(%arg0: i32) -> (i32, i32) {
    %c0_i32 = arith.constant 0 : i32
    %c0_i32_0 = arith.constant 0 : i32
    %c0_i32_1 = arith.constant 0 : i32
    return %c0_i32, %c0_i32_0 : i32, i32
  }
  func.func @transform_4(%arg0: i32) -> (i32, i32) {
    %c0_i32 = arith.constant 0 : i32
    %c0_i32_0 = arith.constant 0 : i32
    %c0_i32_1 = arith.constant 0 : i32
    return %c0_i32, %c0_i32_0 : i32, i32
  }
  func.func @transform_5(%arg0: i32) -> (i32, i32) {
    %c0_i32 = arith.constant 0 : i32
    %c0_i32_0 = arith.constant 0 : i32
    %c0_i32_1 = arith.constant 0 : i32
    return %c0_i32, %c0_i32_0 : i32, i32
  }
  func.func @transform_6(%arg0: i32) -> (i32, i32) {
    %c0_i32 = arith.constant 0 : i32
    %c0_i32_0 = arith.constant 0 : i32
    %c0_i32_1 = arith.constant 0 : i32
    return %c0_i32, %c0_i32_0 : i32, i32
  }
  func.func @transform_7(%arg0: i32) -> (i32, i32) {
    %c0_i32 = arith.constant 0 : i32
    %c0_i32_0 = arith.constant 0 : i32
    return %arg0, %c0_i32 : i32, i32
  }
}

</mosaic_0001>

<llo_original>
// kernel: network_forward.1
$region0: #{network_forward.1}
  #allocation0 [shape = 'u32[]', space=smem, size = 0x4, offset = 0x4, fixed_abs, tag = 'smem constant byte address 0x4 - core index']
  #allocation1 [shape = 'u32[144,128]{1,0:T(1,128)}', space=vmem, size = 0x12000, scoped, tag = 'internal scratch']
  %s0 = inlined_call_operand.hbm [shape: f32[8,40], index: 0, kind: input, shape index: {}]
  %s1 = inlined_call_operand.vmem [shape: bf16[40,128], index: 1, kind: input, shape index: {}]
  %s2 = inlined_call_operand.vmem [shape: f32[1,128], index: 2, kind: input, shape index: {}]
  %s3 = inlined_call_operand.vmem [shape: bf16[128,128], index: 3, kind: input, shape index: {}]
  %s4 = inlined_call_operand.vmem [shape: f32[1,128], index: 4, kind: input, shape index: {}]
  %s5 = inlined_call_operand.vmem [shape: bf16[128,9], index: 5, kind: input, shape index: {}]
  %s6 = inlined_call_operand.hbm [shape: f32[1,9], index: 6, kind: input, shape index: {}]
  %s7 = inlined_call_operand.hbm [shape: f32[8,9], index: 7, kind: output, shape index: {}]
  %s8 = sld [smem:[#allocation0]]
  $region46: #{network_forward.1} parent=0
    _
  %s10 = ssub.s32 1, %s8
  %s11 = scalar_select 0, %s10, %s8
  $region1: #{network_forward.1} parent=0
    #allocation2 [shape = 'u8[65536]{0}', space=vmem, size = 0x10000, scoped, tag = 'input window, operand 0, single buffered']
    #allocation3 [shape = 's32[1]{0}', space=sflag, size = 0x4, scoped, tag = 'scoped memory for network_forward.1']
    #allocation4 [shape = 's32[1]{0}', space=sflag, size = 0x4, scoped, tag = 'scoped memory for network_forward.1']
    #allocation5 [shape = 'u8[512]{0}', space=vmem, size = 0x400, scoped, tag = 'input window, operand 6, single buffered']
    #allocation6 [shape = 's32[1]{0}', space=sflag, size = 0x4, scoped, tag = 'scoped memory for network_forward.1']
    #allocation7 [shape = 'u8[65536]{0}', space=vmem, size = 0x10000, scoped, tag = 'output window, operand 0, single buffered']
    %12 = vsyncpa [#allocation3], 0
    %13 = vsyncpa [#allocation6], 0
    %14 = vsyncpa [#allocation4], 0
    // Predicated region
    $region2: #{network_forward.1} parent=1 // pred_check
      _
    $region3: #{network_forward.1} parent=1 // pred_check_branch
      %16 = sbr.rel (0) target = $region5
    $region4: #{network_forward.1} parent=1 // pred_region
      %s18 = ssub.s32 2048, 128
      %19 = vsyncadd [#allocation3], %s18
      %s20 = sshll.u32 [#allocation2], 4
      %s21 = int_to_ptr.vmem [resolvable:$true] %s20
      %26 = dma.hbm_to_vmem [thread:$0]  %s0, 128, %s21, [#allocation3], 128, 128, 8
    $region5: #{network_forward.1} parent=1 // pred_fallthru
      _
    // Predicated region
    $region6: #{network_forward.1} parent=1 // pred_check
      _
    $region7: #{network_forward.1} parent=1 // pred_check_branch
      %28 = sbr.rel (0) target = $region9
    $region8: #{network_forward.1} parent=1 // pred_region
      _
    $region9: #{network_forward.1} parent=1 // pred_fallthru
      _
    // Predicated region
    $region10: #{network_forward.1} parent=1 // pred_check
      _
    $region11: #{network_forward.1} parent=1 // pred_check_branch
      %30 = sbr.rel (0) target = $region13
    $region12: #{network_forward.1} parent=1 // pred_region
      _
    $region13: #{network_forward.1} parent=1 // pred_fallthru
      _
    // Predicated region
    $region14: #{network_forward.1} parent=1 // pred_check
      _
    $region15: #{network_forward.1} parent=1 // pred_check_branch
      %32 = sbr.rel (0) target = $region17
    $region16: #{network_forward.1} parent=1 // pred_region
      _
    $region17: #{network_forward.1} parent=1 // pred_fallthru
      _
    // Predicated region
    $region18: #{network_forward.1} parent=1 // pred_check
      _
    $region19: #{network_forward.1} parent=1 // pred_check_branch
      %34 = sbr.rel (0) target = $region21
    $region20: #{network_forward.1} parent=1 // pred_region
      _
    $region21: #{network_forward.1} parent=1 // pred_fallthru
      _
    // Predicated region
    $region22: #{network_forward.1} parent=1 // pred_check
      _
    $region23: #{network_forward.1} parent=1 // pred_check_branch
      %36 = sbr.rel (0) target = $region25
    $region24: #{network_forward.1} parent=1 // pred_region
      _
    $region25: #{network_forward.1} parent=1 // pred_fallthru
      _
    // Predicated region
    $region26: #{network_forward.1} parent=1 // pred_check
      _
    $region27: #{network_forward.1} parent=1 // pred_check_branch
      %38 = sbr.rel (0) target = $region29
    $region28: #{network_forward.1} parent=1 // pred_region
      %s40 = ssub.s32 16, 16
      %41 = vsyncadd [#allocation6], %s40
      %s43 = sshll.u32 [#allocation5], 4
      %s44 = int_to_ptr.vmem [resolvable:$true] %s43
      %46 = dma.hbm_to_vmem [thread:$0]  %s6, 16, %s44, [#allocation6]
    $region29: #{network_forward.1} parent=1 // pred_fallthru
      _
    // Predicated region
    $region30: #{network_forward.1} parent=1 // pred_check
      _
    $region31: #{network_forward.1} parent=1 // pred_check_branch
      %48 = sbr.rel (0) target = $region33
    $region32: #{network_forward.1} parent=1 // pred_region
      %49 = dma.done [#allocation3], 2048
    $region33: #{network_forward.1} parent=1 // pred_fallthru
      _
    // Predicated region
    $region34: #{network_forward.1} parent=1 // pred_check
      _
    $region35: #{network_forward.1} parent=1 // pred_check_branch
      %51 = sbr.rel (0) target = $region37
    $region36: #{network_forward.1} parent=1 // pred_region
      %52 = dma.done [#allocation6], 16
    $region37: #{network_forward.1} parent=1 // pred_fallthru
      _
    %v54 = vld [vmem:[#allocation2] sm:$0xff]
    %v55 = vld [vmem:[#allocation2 + $0x8] sm:$0xff]
    %v56 = vld [vmem:[#allocation2 + $0x10] sm:$0xff]
    %v57 = vld [vmem:[#allocation2 + $0x18] sm:$0xff]
    %v58 = vld [vmem:[#allocation2 + $0x20] sm:$0xff]
    %v59 = vld [vmem:[#allocation2 + $0x28] sm:$0xff]
    %v60 = vld [vmem:[#allocation2 + $0x30] sm:$0xff]
    %v61 = vld [vmem:[#allocation2 + $0x38] sm:$0xff]
    %v62 = vld [vmem:[#allocation2 + $0x40] sm:$0xff]
    %v63 = vld [vmem:[#allocation2 + $0x48] sm:$0xff]
    %v64 = vld [vmem:[#allocation2 + $0x50] sm:$0xff]
    %v65 = vld [vmem:[#allocation2 + $0x58] sm:$0xff]
    %v66 = vld [vmem:[#allocation2 + $0x60] sm:$0xff]
    %v67 = vld [vmem:[#allocation2 + $0x68] sm:$0xff]
    %v68 = vld [vmem:[#allocation2 + $0x70] sm:$0xff]
    %v69 = vld [vmem:[#allocation2 + $0x78] sm:$0xff]
    %v70 = vpack.c.bf16 %v55, %v54
    %v71 = vpack.c.bf16 %v57, %v56
    %v72 = vpack.c.bf16 %v59, %v58
    %v73 = vpack.c.bf16 %v61, %v60
    %v74 = vpack.c.bf16 %v63, %v62
    %v75 = vpack.c.bf16 %v65, %v64
    %v76 = vpack.c.bf16 %v67, %v66
    %v77 = vpack.c.bf16 %v69, %v68
    %v78 = vld [vmem:[%s1] sm:$0xf]
    %v79 = vld [vmem:[%s1 + $0x4] sm:$0xf]
    %v80 = vld [vmem:[%s1 + $0x8] sm:$0xf]
    %v81 = vld [vmem:[%s1 + $0xc] sm:$0xf]
    %v82 = vld [vmem:[%s1 + $0x10] sm:$0xf]
    %v83 = vld [vmem:[%s2] sm:$0x1]
    %v85 = vlaneseq
    %v86 = vshrl.u32 %v85, 7
    %v87 = vsub.s32 0, %v86
    %v88 = vrot.slane %v83, %v87
    %v95 = vunpack.c.l.b16 %v78
    %v96 = vunpack.c.l.b16 %v79
    %v97 = vunpack.c.l.b16 %v80
    %v98 = vunpack.c.l.b16 %v81
    %v99 = vunpack.c.l.b16 %v82
    %v100 = vpack.c.b16 %v96, %v95
    %v101 = vpack.c.b16 %v98, %v97
    %v102 = vpack.c.b16 %v99, %v99
    %vm105 = vcmask 326656
    %v107 = vsel %vm105, %v70, 0
    %v110 = vsel %vm105, %v71, 0
    %v113 = vsel %vm105, %v72, 0
    %v116 = vsel %vm105, %v73, 0
    %v119 = vsel %vm105, %v74, 0
    %v122 = vsel %vm105, %v75, 0
    %v125 = vsel %vm105, %v76, 0
    %v128 = vsel %vm105, %v77, 0
    %vm130 = vcmask 1043456
    %v132 = vsel %vm130, %v102, 0
    %134 = vmatprep.subr.bf16.mxu0 0
    %135 = vmatpush1.bf16.msra.mxu0 %v100
    %136 = vmatprep.subr.bf16.mxu0 0
    %137 = vmatpush1.bf16.msra.mxu0 %v101
    %138 = vmatprep.subr.bf16.mxu0 0
    %139 = vmatpush1.bf16.msra.mxu0 %v132
    %140 = vmatprep.subr.bf16.mxu0 0
    %141 = vmatpush1.bf16.msra.mxu0 0
    %142 = vmatprep.subr.bf16.mxu0 0
    %143 = vmatpush1.bf16.msra.mxu0 0
    %144 = vmatprep.subr.bf16.mxu0 0
    %145 = vmatpush1.bf16.msra.mxu0 0
    %146 = vmatprep.subr.bf16.mxu0 0
    %147 = vmatpush1.bf16.msra.mxu0 0
    %148 = vmatprep.subr.bf16.mxu0 0
    %149 = vmatpush1.bf16.msra.mxu0 0
    %150 = vmatprep.subr.bf16.mxu0 0
    %151 = vmatpush1.bf16.msra.mxu0 0
    %152 = vmatprep.subr.bf16.mxu0 0
    %153 = vmatpush1.bf16.msra.mxu0 0
    %154 = vmatprep.subr.bf16.mxu0 0
    %155 = vmatpush1.bf16.msra.mxu0 0
    %156 = vmatprep.subr.bf16.mxu0 0
    %157 = vmatpush1.bf16.msra.mxu0 0
    %158 = vmatprep.subr.bf16.mxu0 0
    %159 = vmatpush1.bf16.msra.mxu0 0
    %160 = vmatprep.subr.bf16.mxu0 0
    %161 = vmatpush1.bf16.msra.mxu0 0
    %162 = vmatprep.subr.bf16.mxu0 0
    %163 = vmatpush1.bf16.msra.mxu0 0
    %164 = vmatprep.subr.bf16.mxu0 0
    %165 = vmatpush1.bf16.msra.mxu0 0
    %166 = vmatprep.mubr.bf16.mxu0 0
    %167 = vmatmul.mubr.bf16.gmra.mrb[0].mxu0 %v107
    %v168 = vpop.f32.mrb[0].mxu0
    %v169 = vadd.f32 %v88, %v168
    %v170 = vpop.f32.mrb[0].mxu0
    %v171 = vpop.f32.mrb[0].mxu0
    %v172 = vadd.f32 %v88, %v171
    %v173 = vpop.f32.mrb[0].mxu0
    %174 = vmatprep.mubr.bf16.mxu0 0
    %175 = vmatmul.mubr.bf16.gmra.mrb[0].mxu0 %v110
    %v176 = vpop.f32.mrb[0].mxu0
    %v177 = vadd.f32 %v88, %v176
    %v178 = vpop.f32.mrb[0].mxu0
    %v179 = vpop.f32.mrb[0].mxu0
    %v180 = vadd.f32 %v88, %v179
    %v181 = vpop.f32.mrb[0].mxu0
    %182 = vmatprep.mubr.bf16.mxu0 0
    %183 = vmatmul.mubr.bf16.gmra.mrb[0].mxu0 %v113
    %v184 = vpop.f32.mrb[0].mxu0
    %v185 = vadd.f32 %v88, %v184
    %v186 = vpop.f32.mrb[0].mxu0
    %v187 = vpop.f32.mrb[0].mxu0
    %v188 = vadd.f32 %v88, %v187
    %v189 = vpop.f32.mrb[0].mxu0
    %190 = vmatprep.mubr.bf16.mxu0 0
    %191 = vmatmul.mubr.bf16.gmra.mrb[0].mxu0 %v116
    %v192 = vpop.f32.mrb[0].mxu0
    %v193 = vadd.f32 %v88, %v192
    %v194 = vpop.f32.mrb[0].mxu0
    %v195 = vpop.f32.mrb[0].mxu0
    %v196 = vadd.f32 %v88, %v195
    %v197 = vpop.f32.mrb[0].mxu0
    %198 = vmatprep.mubr.bf16.mxu0 0
    %199 = vmatmul.mubr.bf16.gmra.mrb[0].mxu0 %v119
    %v200 = vpop.f32.mrb[0].mxu0
    %v201 = vadd.f32 %v88, %v200
    %v202 = vpop.f32.mrb[0].mxu0
    %v203 = vpop.f32.mrb[0].mxu0
    %v204 = vadd.f32 %v88, %v203
    %v205 = vpop.f32.mrb[0].mxu0
    %206 = vmatprep.mubr.bf16.mxu0 0
    %207 = vmatmul.mubr.bf16.gmra.mrb[0].mxu0 %v122
    %v208 = vpop.f32.mrb[0].mxu0
    %v209 = vadd.f32 %v88, %v208
    %v210 = vpop.f32.mrb[0].mxu0
    %v211 = vpop.f32.mrb[0].mxu0
    %v212 = vadd.f32 %v88, %v211
    %v213 = vpop.f32.mrb[0].mxu0
    %214 = vmatprep.mubr.bf16.mxu0 0
    %215 = vmatmul.mubr.bf16.gmra.mrb[0].mxu0 %v125
    %v216 = vpop.f32.mrb[0].mxu0
    %v217 = vadd.f32 %v88, %v216
    %v218 = vpop.f32.mrb[0].mxu0
    %v219 = vpop.f32.mrb[0].mxu0
    %v220 = vadd.f32 %v88, %v219
    %v221 = vpop.f32.mrb[0].mxu0
    %222 = vmatprep.mubr.bf16.mxu0 0
    %223 = vmatmul.mubr.bf16.gmra.mrb[0].mxu0 %v128
    %v224 = vpop.f32.mrb[0].mxu0
    %v225 = vadd.f32 %v88, %v224
    %v226 = vpop.f32.mrb[0].mxu0
    %v227 = vpop.f32.mrb[0].mxu0
    %v228 = vadd.f32 %v88, %v227
    %v229 = vpop.f32.mrb[0].mxu0
    %230 = vdwg.mxu0
    %vm231 = vcmp.gt.f32.partialorder %v169, 0.0
    %vm232 = vcmp.gt.f32.partialorder %v172, 0.0
    %vm233 = vcmp.gt.f32.partialorder %v177, 0.0
    %vm234 = vcmp.gt.f32.partialorder %v180, 0.0
    %vm235 = vcmp.gt.f32.partialorder %v185, 0.0
    %vm236 = vcmp.gt.f32.partialorder %v188, 0.0
    %vm237 = vcmp.gt.f32.partialorder %v193, 0.0
    %vm238 = vcmp.gt.f32.partialorder %v196, 0.0
    %vm239 = vcmp.gt.f32.partialorder %v201, 0.0
    %vm240 = vcmp.gt.f32.partialorder %v204, 0.0
    %vm241 = vcmp.gt.f32.partialorder %v209, 0.0
    %vm242 = vcmp.gt.f32.partialorder %v212, 0.0
    %vm243 = vcmp.gt.f32.partialorder %v217, 0.0
    %vm244 = vcmp.gt.f32.partialorder %v220, 0.0
    %vm245 = vcmp.gt.f32.partialorder %v225, 0.0
    %vm246 = vcmp.gt.f32.partialorder %v228, 0.0
    %v247 = vmul.f32 %v169, 0.01
    %v248 = vmul.f32 %v172, 0.01
    %v249 = vmul.f32 %v177, 0.01
    %v250 = vmul.f32 %v180, 0.01
    %v251 = vmul.f32 %v185, 0.01
    %v252 = vmul.f32 %v188, 0.01
    %v253 = vmul.f32 %v193, 0.01
    %v254 = vmul.f32 %v196, 0.01
    %v255 = vmul.f32 %v201, 0.01
    %v256 = vmul.f32 %v204, 0.01
    %v257 = vmul.f32 %v209, 0.01
    %v258 = vmul.f32 %v212, 0.01
    %v259 = vmul.f32 %v217, 0.01
    %v260 = vmul.f32 %v220, 0.01
    %v261 = vmul.f32 %v225, 0.01
    %v262 = vmul.f32 %v228, 0.01
    %v263 = vsel %vm231, %v169, %v247
    %v264 = vsel %vm232, %v172, %v248
    %v265 = vsel %vm233, %v177, %v249
    %v266 = vsel %vm234, %v180, %v250
    %v267 = vsel %vm235, %v185, %v251
    %v268 = vsel %vm236, %v188, %v252
    %v269 = vsel %vm237, %v193, %v253
    %v270 = vsel %vm238, %v196, %v254
    %v271 = vsel %vm239, %v201, %v255
    %v272 = vsel %vm240, %v204, %v256
    %v273 = vsel %vm241, %v209, %v257
    %v274 = vsel %vm242, %v212, %v258
    %v275 = vsel %vm243, %v217, %v259
    %v276 = vsel %vm244, %v220, %v260
    %v277 = vsel %vm245, %v225, %v261
    %v278 = vsel %vm246, %v228, %v262
    %v279 = vpack.c.bf16 %v264, %v263
    %v280 = vpack.c.bf16 %v266, %v265
    %v281 = vpack.c.bf16 %v268, %v267
    %v282 = vpack.c.bf16 %v270, %v269
    %v283 = vpack.c.bf16 %v272, %v271
    %v284 = vpack.c.bf16 %v274, %v273
    %v285 = vpack.c.bf16 %v276, %v275
    %v286 = vpack.c.bf16 %v278, %v277
    %v287 = vld [vmem:[%s3] sm:$0xf]
    %v288 = vld [vmem:[%s3 + $0x4] sm:$0xf]
    %v289 = vld [vmem:[%s3 + $0x8] sm:$0xf]
    %v290 = vld [vmem:[%s3 + $0xc] sm:$0xf]
    %v291 = vld [vmem:[%s3 + $0x10] sm:$0xf]
    %v292 = vld [vmem:[%s3 + $0x14] sm:$0xf]
    %v293 = vld [vmem:[%s3 + $0x18] sm:$0xf]
    %v294 = vld [vmem:[%s3 + $0x1c] sm:$0xf]
    %v295 = vld [vmem:[%s3 + $0x20] sm:$0xf]
    %v296 = vld [vmem:[%s3 + $0x24] sm:$0xf]
    %v297 = vld [vmem:[%s3 + $0x28] sm:$0xf]
    %v298 = vld [vmem:[%s3 + $0x2c] sm:$0xf]
    %v299 = vld [vmem:[%s3 + $0x30] sm:$0xf]
    %v300 = vld [vmem:[%s3 + $0x34] sm:$0xf]
    %v301 = vld [vmem:[%s3 + $0x38] sm:$0xf]
    %v302 = vld [vmem:[%s3 + $0x3c] sm:$0xf]
    %v303 = vld [vmem:[%s4] sm:$0x1]
    %v305 = vlaneseq
    %v306 = vshrl.u32 %v305, 7
    %v307 = vsub.s32 0, %v306
    %v308 = vrot.slane %v303, %v307
    %v326 = vunpack.c.l.b16 %v287
    %v327 = vunpack.c.l.b16 %v288
    %v328 = vunpack.c.l.b16 %v289
    %v329 = vunpack.c.l.b16 %v290
    %v330 = vunpack.c.l.b16 %v291
    %v331 = vunpack.c.l.b16 %v292
    %v332 = vunpack.c.l.b16 %v293
    %v333 = vunpack.c.l.b16 %v294
    %v334 = vunpack.c.l.b16 %v295
    %v335 = vunpack.c.l.b16 %v296
    %v336 = vunpack.c.l.b16 %v297
    %v337 = vunpack.c.l.b16 %v298
    %v338 = vunpack.c.l.b16 %v299
    %v339 = vunpack.c.l.b16 %v300
    %v340 = vunpack.c.l.b16 %v301
    %v341 = vunpack.c.l.b16 %v302
    %v342 = vpack.c.b16 %v327, %v326
    %v343 = vpack.c.b16 %v329, %v328
    %v344 = vpack.c.b16 %v331, %v330
    %v345 = vpack.c.b16 %v333, %v332
    %v346 = vpack.c.b16 %v335, %v334
    %v347 = vpack.c.b16 %v337, %v336
    %v348 = vpack.c.b16 %v339, %v338
    %v349 = vpack.c.b16 %v341, %v340
    %358 = vmatprep.subr.bf16.mxu0 0
    %359 = vmatpush1.bf16.msra.mxu0 %v342
    %360 = vmatprep.subr.bf16.mxu0 0
    %361 = vmatpush1.bf16.msra.mxu0 %v343
    %362 = vmatprep.subr.bf16.mxu0 0
    %363 = vmatpush1.bf16.msra.mxu0 %v344
    %364 = vmatprep.subr.bf16.mxu0 0
    %365 = vmatpush1.bf16.msra.mxu0 %v345
    %366 = vmatprep.subr.bf16.mxu0 0
    %367 = vmatpush1.bf16.msra.mxu0 %v346
    %368 = vmatprep.subr.bf16.mxu0 0
    %369 = vmatpush1.bf16.msra.mxu0 %v347
    %370 = vmatprep.subr.bf16.mxu0 0
    %371 = vmatpush1.bf16.msra.mxu0 %v348
    %372 = vmatprep.subr.bf16.mxu0 0
    %373 = vmatpush1.bf16.msra.mxu0 %v349
    %374 = vmatprep.subr.bf16.mxu0 0
    %375 = vmatpush1.bf16.msra.mxu0 0
    %376 = vmatprep.subr.bf16.mxu0 0
    %377 = vmatpush1.bf16.msra.mxu0 0
    %378 = vmatprep.subr.bf16.mxu0 0
    %379 = vmatpush1.bf16.msra.mxu0 0
    %380 = vmatprep.subr.bf16.mxu0 0
    %381 = vmatpush1.bf16.msra.mxu0 0
    %382 = vmatprep.subr.bf16.mxu0 0
    %383 = vmatpush1.bf16.msra.mxu0 0
    %384 = vmatprep.subr.bf16.mxu0 0
    %385 = vmatpush1.bf16.msra.mxu0 0
    %386 = vmatprep.subr.bf16.mxu0 0
    %387 = vmatpush1.bf16.msra.mxu0 0
    %388 = vmatprep.subr.bf16.mxu0 0
    %389 = vmatpush1.bf16.msra.mxu0 0
    %390 = vmatprep.mubr.bf16.mxu0 0
    %391 = vmatmul.mubr.bf16.gmra.mrb[0].mxu0 %v279
    %v392 = vpop.f32.mrb[0].mxu0
    %v393 = vadd.f32 %v308, %v392
    %v394 = vpop.f32.mrb[0].mxu0
    %v395 = vpop.f32.mrb[0].mxu0
    %v396 = vadd.f32 %v308, %v395
    %v397 = vpop.f32.mrb[0].mxu0
    %398 = vmatprep.mubr.bf16.mxu0 0
    %399 = vmatmul.mubr.bf16.gmra.mrb[0].mxu0 %v280
    %v400 = vpop.f32.mrb[0].mxu0
    %v401 = vadd.f32 %v308, %v400
    %v402 = vpop.f32.mrb[0].mxu0
    %v403 = vpop.f32.mrb[0].mxu0
    %v404 = vadd.f32 %v308, %v403
    %v405 = vpop.f32.mrb[0].mxu0
    %406 = vmatprep.mubr.bf16.mxu0 0
    %407 = vmatmul.mubr.bf16.gmra.mrb[0].mxu0 %v281
    %v408 = vpop.f32.mrb[0].mxu0
    %v409 = vadd.f32 %v308, %v408
    %v410 = vpop.f32.mrb[0].mxu0
    %v411 = vpop.f32.mrb[0].mxu0
    %v412 = vadd.f32 %v308, %v411
    %v413 = vpop.f32.mrb[0].mxu0
    %414 = vmatprep.mubr.bf16.mxu0 0
    %415 = vmatmul.mubr.bf16.gmra.mrb[0].mxu0 %v282
    %v416 = vpop.f32.mrb[0].mxu0
    %v417 = vadd.f32 %v308, %v416
    %v418 = vpop.f32.mrb[0].mxu0
    %v419 = vpop.f32.mrb[0].mxu0
    %v420 = vadd.f32 %v308, %v419
    %v421 = vpop.f32.mrb[0].mxu0
    %422 = vmatprep.mubr.bf16.mxu0 0
    %423 = vmatmul.mubr.bf16.gmra.mrb[0].mxu0 %v283
    %v424 = vpop.f32.mrb[0].mxu0
    %v425 = vadd.f32 %v308, %v424
    %v426 = vpop.f32.mrb[0].mxu0
    %v427 = vpop.f32.mrb[0].mxu0
    %v428 = vadd.f32 %v308, %v427
    %v429 = vpop.f32.mrb[0].mxu0
    %430 = vmatprep.mubr.bf16.mxu0 0
    %431 = vmatmul.mubr.bf16.gmra.mrb[0].mxu0 %v284
    %v432 = vpop.f32.mrb[0].mxu0
    %v433 = vadd.f32 %v308, %v432
    %v434 = vpop.f32.mrb[0].mxu0
    %v435 = vpop.f32.mrb[0].mxu0
    %v436 = vadd.f32 %v308, %v435
    %v437 = vpop.f32.mrb[0].mxu0
    %438 = vmatprep.mubr.bf16.mxu0 0
    %439 = vmatmul.mubr.bf16.gmra.mrb[0].mxu0 %v285
    %v440 = vpop.f32.mrb[0].mxu0
    %v441 = vadd.f32 %v308, %v440
    %v442 = vpop.f32.mrb[0].mxu0
    %v443 = vpop.f32.mrb[0].mxu0
    %v444 = vadd.f32 %v308, %v443
    %v445 = vpop.f32.mrb[0].mxu0
    %446 = vmatprep.mubr.bf16.mxu0 0
    %447 = vmatmul.mubr.bf16.gmra.mrb[0].mxu0 %v286
    %v448 = vpop.f32.mrb[0].mxu0
    %v449 = vadd.f32 %v308, %v448
    %v450 = vpop.f32.mrb[0].mxu0
    %v451 = vpop.f32.mrb[0].mxu0
    %v452 = vadd.f32 %v308, %v451
    %v453 = vpop.f32.mrb[0].mxu0
    %454 = vdwg.mxu0
    %vm455 = vcmp.gt.f32.partialorder %v393, 0.0
    %vm456 = vcmp.gt.f32.partialorder %v396, 0.0
    %vm457 = vcmp.gt.f32.partialorder %v401, 0.0
    %vm458 = vcmp.gt.f32.partialorder %v404, 0.0
    %vm459 = vcmp.gt.f32.partialorder %v409, 0.0
    %vm460 = vcmp.gt.f32.partialorder %v412, 0.0
    %vm461 = vcmp.gt.f32.partialorder %v417, 0.0
    %vm462 = vcmp.gt.f32.partialorder %v420, 0.0
    %vm463 = vcmp.gt.f32.partialorder %v425, 0.0
    %vm464 = vcmp.gt.f32.partialorder %v428, 0.0
    %vm465 = vcmp.gt.f32.partialorder %v433, 0.0
    %vm466 = vcmp.gt.f32.partialorder %v436, 0.0
    %vm467 = vcmp.gt.f32.partialorder %v441, 0.0
    %vm468 = vcmp.gt.f32.partialorder %v444, 0.0
    %vm469 = vcmp.gt.f32.partialorder %v449, 0.0
    %vm470 = vcmp.gt.f32.partialorder %v452, 0.0
    %v471 = vmul.f32 %v393, 0.01
    %v472 = vmul.f32 %v396, 0.01
    %v473 = vmul.f32 %v401, 0.01
    %v474 = vmul.f32 %v404, 0.01
    %v475 = vmul.f32 %v409, 0.01
    %v476 = vmul.f32 %v412, 0.01
    %v477 = vmul.f32 %v417, 0.01
    %v478 = vmul.f32 %v420, 0.01
    %v479 = vmul.f32 %v425, 0.01
    %v480 = vmul.f32 %v428, 0.01
    %v481 = vmul.f32 %v433, 0.01
    %v482 = vmul.f32 %v436, 0.01
    %v483 = vmul.f32 %v441, 0.01
    %v484 = vmul.f32 %v444, 0.01
    %v485 = vmul.f32 %v449, 0.01
    %v486 = vmul.f32 %v452, 0.01
    %v487 = vsel %vm455, %v393, %v471
    %v488 = vsel %vm456, %v396, %v472
    %v489 = vsel %vm457, %v401, %v473
    %v490 = vsel %vm458, %v404, %v474
    %v491 = vsel %vm459, %v409, %v475
    %v492 = vsel %vm460, %v412, %v476
    %v493 = vsel %vm461, %v417, %v477
    %v494 = vsel %vm462, %v420, %v478
    %v495 = vsel %vm463, %v425, %v479
    %v496 = vsel %vm464, %v428, %v480
    %v497 = vsel %vm465, %v433, %v481
    %v498 = vsel %vm466, %v436, %v482
    %v499 = vsel %vm467, %v441, %v483
    %v500 = vsel %vm468, %v444, %v484
    %v501 = vsel %vm469, %v449, %v485
    %v502 = vsel %vm470, %v452, %v486
    %v503 = vpack.c.bf16 %v488, %v487
    %v504 = vpack.c.bf16 %v490, %v489
    %v505 = vpack.c.bf16 %v492, %v491
    %v506 = vpack.c.bf16 %v494, %v493
    %v507 = vpack.c.bf16 %v496, %v495
    %v508 = vpack.c.bf16 %v498, %v497
    %v509 = vpack.c.bf16 %v500, %v499
    %v510 = vpack.c.bf16 %v502, %v501
    %v511 = vld [vmem:[%s5] sm:$0xf]
    %v512 = vld [vmem:[%s5 + $0x4] sm:$0xf]
    %v513 = vld [vmem:[%s5 + $0x8] sm:$0xf]
    %v514 = vld [vmem:[%s5 + $0xc] sm:$0xf]
    %v515 = vld [vmem:[%s5 + $0x10] sm:$0xf]
    %v516 = vld [vmem:[%s5 + $0x14] sm:$0xf]
    %v517 = vld [vmem:[%s5 + $0x18] sm:$0xf]
    %v518 = vld [vmem:[%s5 + $0x1c] sm:$0xf]
    %v519 = vld [vmem:[%s5 + $0x20] sm:$0xf]
    %v520 = vld [vmem:[%s5 + $0x24] sm:$0xf]
    %v521 = vld [vmem:[%s5 + $0x28] sm:$0xf]
    %v522 = vld [vmem:[%s5 + $0x2c] sm:$0xf]
    %v523 = vld [vmem:[%s5 + $0x30] sm:$0xf]
    %v524 = vld [vmem:[%s5 + $0x34] sm:$0xf]
    %v525 = vld [vmem:[%s5 + $0x38] sm:$0xf]
    %v526 = vld [vmem:[%s5 + $0x3c] sm:$0xf]
    %v527 = vld [vmem:[#allocation5] sm:$0x1]
    %v529 = vlaneseq
    %v530 = vshrl.u32 %v529, 7
    %v531 = vsub.s32 0, %v530
    %v532 = vrot.slane %v527, %v531
    %v550 = vunpack.c.l.b16 %v511
    %v551 = vunpack.c.l.b16 %v512
    %v552 = vunpack.c.l.b16 %v513
    %v553 = vunpack.c.l.b16 %v514
    %v554 = vunpack.c.l.b16 %v515
    %v555 = vunpack.c.l.b16 %v516
    %v556 = vunpack.c.l.b16 %v517
    %v557 = vunpack.c.l.b16 %v518
    %v558 = vunpack.c.l.b16 %v519
    %v559 = vunpack.c.l.b16 %v520
    %v560 = vunpack.c.l.b16 %v521
    %v561 = vunpack.c.l.b16 %v522
    %v562 = vunpack.c.l.b16 %v523
    %v563 = vunpack.c.l.b16 %v524
    %v564 = vunpack.c.l.b16 %v525
    %v565 = vunpack.c.l.b16 %v526
    %v566 = vpack.c.b16 %v551, %v550
    %v567 = vpack.c.b16 %v553, %v552
    %v568 = vpack.c.b16 %v555, %v554
    %v569 = vpack.c.b16 %v557, %v556
    %v570 = vpack.c.b16 %v559, %v558
    %v571 = vpack.c.b16 %v561, %v560
    %v572 = vpack.c.b16 %v563, %v562
    %v573 = vpack.c.b16 %v565, %v564
    %582 = vmatprep.subr.bf16.mxu0 0
    %583 = vmatpush1.bf16.msra.mxu0 %v566
    %584 = vmatprep.subr.bf16.mxu0 0
    %585 = vmatpush1.bf16.msra.mxu0 %v567
    %586 = vmatprep.subr.bf16.mxu0 0
    %587 = vmatpush1.bf16.msra.mxu0 %v568
    %588 = vmatprep.subr.bf16.mxu0 0
    %589 = vmatpush1.bf16.msra.mxu0 %v569
    %590 = vmatprep.subr.bf16.mxu0 0
    %591 = vmatpush1.bf16.msra.mxu0 %v570
    %592 = vmatprep.subr.bf16.mxu0 0
    %593 = vmatpush1.bf16.msra.mxu0 %v571
    %594 = vmatprep.subr.bf16.mxu0 0
    %595 = vmatpush1.bf16.msra.mxu0 %v572
    %596 = vmatprep.subr.bf16.mxu0 0
    %597 = vmatpush1.bf16.msra.mxu0 %v573
    %598 = vmatprep.subr.bf16.mxu0 0
    %599 = vmatpush1.bf16.msra.mxu0 0
    %600 = vmatprep.subr.bf16.mxu0 0
    %601 = vmatpush1.bf16.msra.mxu0 0
    %602 = vmatprep.subr.bf16.mxu0 0
    %603 = vmatpush1.bf16.msra.mxu0 0
    %604 = vmatprep.subr.bf16.mxu0 0
    %605 = vmatpush1.bf16.msra.mxu0 0
    %606 = vmatprep.subr.bf16.mxu0 0
    %607 = vmatpush1.bf16.msra.mxu0 0
    %608 = vmatprep.subr.bf16.mxu0 0
    %609 = vmatpush1.bf16.msra.mxu0 0
    %610 = vmatprep.subr.bf16.mxu0 0
    %611 = vmatpush1.bf16.msra.mxu0 0
    %612 = vmatprep.subr.bf16.mxu0 0
    %613 = vmatpush1.bf16.msra.mxu0 0
    %614 = vmatprep.mubr.bf16.mxu0 0
    %615 = vmatmul.mubr.bf16.gmra.mrb[0].mxu0 %v503
    %v616 = vpop.f32.mrb[0].mxu0
    %v617 = vadd.f32 %v532, %v616
    %v618 = vpop.f32.mrb[0].mxu0
    %v619 = vpop.f32.mrb[0].mxu0
    %v620 = vadd.f32 %v532, %v619
    %v621 = vpop.f32.mrb[0].mxu0
    %622 = vmatprep.mubr.bf16.mxu0 0
    %623 = vmatmul.mubr.bf16.gmra.mrb[0].mxu0 %v504
    %v624 = vpop.f32.mrb[0].mxu0
    %v625 = vadd.f32 %v532, %v624
    %v626 = vpop.f32.mrb[0].mxu0
    %v627 = vpop.f32.mrb[0].mxu0
    %v628 = vadd.f32 %v532, %v627
    %v629 = vpop.f32.mrb[0].mxu0
    %630 = vmatprep.mubr.bf16.mxu0 0
    %631 = vmatmul.mubr.bf16.gmra.mrb[0].mxu0 %v505
    %v632 = vpop.f32.mrb[0].mxu0
    %v633 = vadd.f32 %v532, %v632
    %v634 = vpop.f32.mrb[0].mxu0
    %v635 = vpop.f32.mrb[0].mxu0
    %v636 = vadd.f32 %v532, %v635
    %v637 = vpop.f32.mrb[0].mxu0
    %638 = vmatprep.mubr.bf16.mxu0 0
    %639 = vmatmul.mubr.bf16.gmra.mrb[0].mxu0 %v506
    %v640 = vpop.f32.mrb[0].mxu0
    %v641 = vadd.f32 %v532, %v640
    %v642 = vpop.f32.mrb[0].mxu0
    %v643 = vpop.f32.mrb[0].mxu0
    %v644 = vadd.f32 %v532, %v643
    %v645 = vpop.f32.mrb[0].mxu0
    %646 = vmatprep.mubr.bf16.mxu0 0
    %647 = vmatmul.mubr.bf16.gmra.mrb[0].mxu0 %v507
    %v648 = vpop.f32.mrb[0].mxu0
    %v649 = vadd.f32 %v532, %v648
    %v650 = vpop.f32.mrb[0].mxu0
    %v651 = vpop.f32.mrb[0].mxu0
    %v652 = vadd.f32 %v532, %v651
    %v653 = vpop.f32.mrb[0].mxu0
    %654 = vmatprep.mubr.bf16.mxu0 0
    %655 = vmatmul.mubr.bf16.gmra.mrb[0].mxu0 %v508
    %v656 = vpop.f32.mrb[0].mxu0
    %v657 = vadd.f32 %v532, %v656
    %v658 = vpop.f32.mrb[0].mxu0
    %v659 = vpop.f32.mrb[0].mxu0
    %v660 = vadd.f32 %v532, %v659
    %v661 = vpop.f32.mrb[0].mxu0
    %662 = vmatprep.mubr.bf16.mxu0 0
    %663 = vmatmul.mubr.bf16.gmra.mrb[0].mxu0 %v509
    %v664 = vpop.f32.mrb[0].mxu0
    %v665 = vadd.f32 %v532, %v664
    %v666 = vpop.f32.mrb[0].mxu0
    %v667 = vpop.f32.mrb[0].mxu0
    %v668 = vadd.f32 %v532, %v667
    %v669 = vpop.f32.mrb[0].mxu0
    %670 = vmatprep.mubr.bf16.mxu0 0
    %671 = vmatmul.mubr.bf16.gmra.mrb[0].mxu0 %v510
    %v672 = vpop.f32.mrb[0].mxu0
    %v673 = vadd.f32 %v532, %v672
    %v674 = vpop.f32.mrb[0].mxu0
    %v675 = vpop.f32.mrb[0].mxu0
    %v676 = vadd.f32 %v532, %v675
    %v677 = vpop.f32.mrb[0].mxu0
    %678 = vdwg.mxu0
    %v679 = vmul.f32 %v617, 0.5
    %v680 = vmul.f32 %v620, 0.5
    %v681 = vmul.f32 %v625, 0.5
    %v682 = vmul.f32 %v628, 0.5
    %v683 = vmul.f32 %v633, 0.5
    %v684 = vmul.f32 %v636, 0.5
    %v685 = vmul.f32 %v641, 0.5
    %v686 = vmul.f32 %v644, 0.5
    %v687 = vmul.f32 %v649, 0.5
    %v688 = vmul.f32 %v652, 0.5
    %v689 = vmul.f32 %v657, 0.5
    %v690 = vmul.f32 %v660, 0.5
    %v691 = vmul.f32 %v665, 0.5
    %v692 = vmul.f32 %v668, 0.5
    %v693 = vmul.f32 %v673, 0.5
    %v694 = vmul.f32 %v676, 0.5
    %v695 = vtanh.pop %v679
    %v696 = vtanh.pop %v680
    %v697 = vtanh.pop %v681
    %v698 = vtanh.pop %v682
    %v699 = vtanh.pop %v683
    %v700 = vtanh.pop %v684
    %v701 = vtanh.pop %v685
    %v702 = vtanh.pop %v686
    %v703 = vtanh.pop %v687
    %v704 = vtanh.pop %v688
    %v705 = vtanh.pop %v689
    %v706 = vtanh.pop %v690
    %v707 = vtanh.pop %v691
    %v708 = vtanh.pop %v692
    %v709 = vtanh.pop %v693
    %v710 = vtanh.pop %v694
    %v711 = vadd.f32 %v695, 1.0
    %v712 = vadd.f32 %v696, 1.0
    %v713 = vadd.f32 %v697, 1.0
    %v714 = vadd.f32 %v698, 1.0
    %v715 = vadd.f32 %v699, 1.0
    %v716 = vadd.f32 %v700, 1.0
    %v717 = vadd.f32 %v701, 1.0
    %v718 = vadd.f32 %v702, 1.0
    %v719 = vadd.f32 %v703, 1.0
    %v720 = vadd.f32 %v704, 1.0
    %v721 = vadd.f32 %v705, 1.0
    %v722 = vadd.f32 %v706, 1.0
    %v723 = vadd.f32 %v707, 1.0
    %v724 = vadd.f32 %v708, 1.0
    %v725 = vadd.f32 %v709, 1.0
    %v726 = vadd.f32 %v710, 1.0
    %v727 = vmul.f32 %v711, 0.5
    %v728 = vmul.f32 %v712, 0.5
    %v729 = vmul.f32 %v713, 0.5
    %v730 = vmul.f32 %v714, 0.5
    %v731 = vmul.f32 %v715, 0.5
    %v732 = vmul.f32 %v716, 0.5
    %v733 = vmul.f32 %v717, 0.5
    %v734 = vmul.f32 %v718, 0.5
    %v735 = vmul.f32 %v719, 0.5
    %v736 = vmul.f32 %v720, 0.5
    %v737 = vmul.f32 %v721, 0.5
    %v738 = vmul.f32 %v722, 0.5
    %v739 = vmul.f32 %v723, 0.5
    %v740 = vmul.f32 %v724, 0.5
    %v741 = vmul.f32 %v725, 0.5
    %v742 = vmul.f32 %v726, 0.5
    %vm743 = vcmask 72704
    %744 = vst.msk [vmem:[#allocation7] sm:$0xff] %vm743, %v727
    %745 = vst.msk [vmem:[#allocation7 + $0x8] sm:$0xff] %vm743, %v728
    %746 = vst.msk [vmem:[#allocation7 + $0x10] sm:$0xff] %vm743, %v729
    %747 = vst.msk [vmem:[#allocation7 + $0x18] sm:$0xff] %vm743, %v730
    %748 = vst.msk [vmem:[#allocation7 + $0x20] sm:$0xff] %vm743, %v731
    %749 = vst.msk [vmem:[#allocation7 + $0x28] sm:$0xff] %vm743, %v732
    %750 = vst.msk [vmem:[#allocation7 + $0x30] sm:$0xff] %vm743, %v733
    %751 = vst.msk [vmem:[#allocation7 + $0x38] sm:$0xff] %vm743, %v734
    %752 = vst.msk [vmem:[#allocation7 + $0x40] sm:$0xff] %vm743, %v735
    %753 = vst.msk [vmem:[#allocation7 + $0x48] sm:$0xff] %vm743, %v736
    %754 = vst.msk [vmem:[#allocation7 + $0x50] sm:$0xff] %vm743, %v737
    %755 = vst.msk [vmem:[#allocation7 + $0x58] sm:$0xff] %vm743, %v738
    %756 = vst.msk [vmem:[#allocation7 + $0x60] sm:$0xff] %vm743, %v739
    %757 = vst.msk [vmem:[#allocation7 + $0x68] sm:$0xff] %vm743, %v740
    %758 = vst.msk [vmem:[#allocation7 + $0x70] sm:$0xff] %vm743, %v741
    %759 = vst.msk [vmem:[#allocation7 + $0x78] sm:$0xff] %vm743, %v742
    // Predicated region
    $region38: #{network_forward.1} parent=1 // pred_check
      _
    $region39: #{network_forward.1} parent=1 // pred_check_branch
      %761 = sbr.rel (0) target = $region41
    $region40: #{network_forward.1} parent=1 // pred_region
      %s763 = ssub.s32 2048, 128
      %764 = vsyncadd [#allocation4], %s763
      %s765 = sshll.u32 [#allocation7], 4
      %s766 = int_to_ptr.vmem [resolvable:$true] %s765
      %771 = dma.vmem_to_hbm [thread:$0]  %s766, 128, %s7, [#allocation4], 128, 128, 8
    $region41: #{network_forward.1} parent=1 // pred_fallthru
      _
    // Predicated region
    $region42: #{network_forward.1} parent=1 // pred_check
      _
    $region43: #{network_forward.1} parent=1 // pred_check_branch
      %773 = sbr.rel (0) target = $region45
    $region44: #{network_forward.1} parent=1 // pred_region
      %774 = dma.done [#allocation4], 2048
    $region45: #{network_forward.1} parent=1 // pred_fallthru
      _
    %775 = vsyncpa [#allocation3], 1
    %776 = vsyncpa [#allocation6], 1
    %777 = vsyncpa [#allocation4], 1

</llo_original>
